<compile_context>
chip_gen: v5e
topology: v5e:2x2
jax: 0.10.0
libtpu: 0.0.40
codegen_flags: <defaults>
</compile_context>

<pallas_src>
import numpy as np
import jax
import jax.numpy as jnp
from jax.experimental import pallas as pl
from jax.experimental.pallas import tpu as pltpu

NEG_SLOPE = 0.01
BN_EPS = 1e-5


def causal_trans_conv_block(x_nchw, weight, bias, gamma, beta,
                            running_mean, running_var,
                            kernel_size, stride):
    """x_nchw: [B, Cin, F, T]; weight: PyTorch ConvTranspose2d weight [Cin, Cout, kH, kW]."""
    B, Cin, F, T = x_nchw.shape
    kH, kW = kernel_size
    sH, sW = stride
    Cout = weight.shape[1]
    Ho = (F - 1) * sH + kH
    Wo = (T - 1) * sW + kW

    # ---- polyphase geometry (all static Python ints) ------------------------
    nH = -(-kH // sH)                       # sub-taps per output phase (H)
    nW = -(-kW // sW)                       # sub-taps per output phase (W)
    P = sH * sW                             # number of output phases
    Kp = nH * nW * Cin                      # K of the single fused matmul
    Hpp, Wpp = F + 2 * (nH - 1), T + 2 * (nW - 1)    # compact padded input
    Homax, Womax = F - 1 + nH, T - 1 + nW            # per-phase output extent
    Npix = Homax * Wpp                      # lane width of patch / output blocks
    Nflat = Hpp * Wpp + (nW - 1)            # flattened input + tail guard

    # ---- XLA glue: compact input, folded weights / BN -----------------------
    aH, aW = nH - 1, nW - 1
    xp = jnp.pad(x_nchw, ((0, 0), (0, 0), (aH, aH), (aW, aW)))
    x_flat = xp.reshape(B, Cin, Hpp * Wpp)
    x_flat = jnp.pad(x_flat, ((0, 0), (0, 0), (0, nW - 1)))   # guard for "wide" slices
    x_flat = x_flat.astype(jnp.bfloat16)

    # weight -> [P*Cout, Kp]; row (ph*sW+pw)*Cout+co, col (i*nW+j)*Cin+ci holds
    # W[ci, co, ph+(nH-1-i)*sH, pw+(nW-1-j)*sW] (zero for phantom taps >= kH/kW).
    w_pad = jnp.pad(weight, ((0, 0), (0, 0), (0, nH * sH - kH), (0, nW * sW - kW)))
    w_r = w_pad.reshape(Cin, Cout, nH, sH, nW, sW)            # [ci,co,i,ph,j,pw]
    w_f = w_r[:, :, ::-1, :, ::-1, :]                          # flip sub-taps
    w_mat = jnp.transpose(w_f, (3, 5, 1, 2, 4, 0)).reshape(P * Cout, Kp)
    w_mat = w_mat.astype(jnp.bfloat16)

    scale = gamma / jnp.sqrt(running_var + BN_EPS)             # [Cout]
    shift = (bias - running_mean) * scale + beta               # conv bias folded in
    scale_all = jnp.tile(scale, P).reshape(P * Cout, 1).astype(jnp.float32)
    shift_all = jnp.tile(shift, P).reshape(P * Cout, 1).astype(jnp.float32)

    # ---- Pallas kernel: im2col gather + ONE matmul + BN + LeakyReLU ----------
    def kernel(x_ref, w_ref, scale_ref, shift_ref, o_ref, patch_ref):
        # x_ref:     [1, Cin, Nflat]    bf16 (compact, flattened, padded input)
        # w_ref:     [P*Cout, Kp]       bf16
        # scale_ref: [P*Cout, 1]        f32
        # shift_ref: [P*Cout, 1]        f32
        # o_ref:     [1, P*Cout, Npix]  f32
        # patch_ref: [Kp, Npix]         bf16 VMEM scratch (im2col patch)
        for i in range(nH):                       # static, tiny (nH*nW pieces)
            for j in range(nW):
                t = i * nW + j
                off = i * Wpp + j                 # shifted window of the flat input
                patch_ref[t * Cin:(t + 1) * Cin, :] = x_ref[0, :, off:off + Npix]
        acc = jnp.dot(w_ref[...], patch_ref[...],
                      preferred_element_type=jnp.float32)      # [P*Cout, Npix]
        y = acc * scale_ref[...] + shift_ref[...]              # BN (+ conv bias)
        o_ref[0] = jnp.maximum(y, NEG_SLOPE * y)               # LeakyReLU

    out_wide = pl.pallas_call(
        kernel,
        out_shape=jax.ShapeDtypeStruct((B, P * Cout, Npix), jnp.float32),
        grid_spec=pltpu.PrefetchScalarGridSpec(
            num_scalar_prefetch=0,
            grid=(B,),
            in_specs=[
                pl.BlockSpec((1, Cin, Nflat), lambda b: (b, 0, 0)),
                pl.BlockSpec((P * Cout, Kp), lambda b: (0, 0)),
                pl.BlockSpec((P * Cout, 1), lambda b: (0, 0)),
                pl.BlockSpec((P * Cout, 1), lambda b: (0, 0)),
            ],
            out_specs=pl.BlockSpec((1, P * Cout, Npix), lambda b: (b, 0, 0)),
            scratch_shapes=[pltpu.VMEM((Kp, Npix), jnp.bfloat16)],
        ),
        compiler_params=pltpu.CompilerParams(
            dimension_semantics=("parallel",)),
    )(x_flat, w_mat, scale_all, shift_all)

    # ---- XLA glue: interleave phases back into NCHW and crop -----------------
    t = out_wide.reshape(B, sH, sW, Cout, Homax, Wpp)[..., :Womax]
    t = jnp.transpose(t, (0, 3, 4, 1, 5, 2))       # [B, Cout, Ho', sH, Wo', sW]
    t = t.reshape(B, Cout, Homax * sH, Womax * sW)
    return t[:, :, :Ho, :Wo]                       # [B, Cout, Ho, Wo]  (NCHW)


def _reference(x, W, b, gamma, beta, mean, var, kernel_size, stride):
    """Brute-force numpy reference of the PyTorch forward (eval mode)."""
    x, W, b = np.asarray(x), np.asarray(W), np.asarray(b)
    gamma, beta = np.asarray(gamma), np.asarray(beta)
    mean, var = np.asarray(mean), np.asarray(var)
    B, Cin, F, T = x.shape
    kH, kW = kernel_size
    sH, sW = stride
    Cout = W.shape[1]
    Ho, Wo = (F - 1) * sH + kH, (T - 1) * sW + kW
    y = np.zeros((B, Cout, Ho, Wo), np.float32)
    for h in range(F):
        for w in range(T):
            contrib = np.einsum('bc,cokl->bokl', x[:, :, h, w], W)
            y[:, :, h * sH:h * sH + kH, w * sW:w * sW + kW] += contrib
    y += b[None, :, None, None]
    y = (y - mean[None, :, None, None]) / np.sqrt(var + BN_EPS)[None, :, None, None]
    y = y * gamma[None, :, None, None] + beta[None, :, None, None]
    return np.where(y >= 0, y, NEG_SLOPE * y)


if __name__ == "__main__":
    B, Cin, Cout = 2, 4, 8
    F = T = 16
    kernel_size = (3, 3)
    stride = (2, 2)
    kH, kW = kernel_size

    key = jax.random.PRNGKey(0)
    ks = jax.random.split(key, 7)
    # Quantize x / weight to bf16-representable values so the bf16 MXU path
    # matches the f64 reference up to f32 accumulation order.
    x = jax.random.normal(ks[0], (B, Cin, F, T), jnp.float32)
    x = x.astype(jnp.bfloat16).astype(jnp.float32)
    weight = jax.random.normal(ks[1], (Cin, Cout, kH, kW), jnp.float32) * 0.1
    weight = weight.astype(jnp.bfloat16).astype(jnp.float32)
    bias = jax.random.normal(ks[2], (Cout,), jnp.float32) * 0.1
    gamma = 1.0 + 0.1 * jax.random.normal(ks[3], (Cout,), jnp.float32)
    beta = 0.1 * jax.random.normal(ks[4], (Cout,), jnp.float32)
    running_mean = 0.1 * jax.random.normal(ks[5], (Cout,), jnp.float32)
    running_var = jax.random.uniform(ks[6], (Cout,), jnp.float32, 0.5, 1.5)

    out = causal_trans_conv_block(x, weight, bias, gamma, beta,
                                  running_mean, running_var,
                                  kernel_size, stride)
    out = jax.block_until_ready(out)

    ref = _reference(x, weight, bias, gamma, beta,
                     running_mean, running_var, kernel_size, stride)
    np.testing.assert_allclose(np.asarray(out), ref, rtol=2e-3, atol=2e-3)
    print("KERNEL_OK")
</pallas_src>

<mosaic_0001>
module attributes {stable_mosaic.version = 11 : i64} {
  func.func @kernel(%arg0: i32, %arg1: memref<1x4x325xbf16, #tpu.memory_space<vmem>>, %arg2: memref<32x16xbf16, #tpu.memory_space<vmem>>, %arg3: memref<32x1xf32, #tpu.memory_space<vmem>>, %arg4: memref<32x1xf32, #tpu.memory_space<vmem>>, %arg5: memref<1x32x306xf32, #tpu.memory_space<vmem>>, %arg6: memref<16x306xbf16, #tpu.memory_space<vmem>>) attributes {dimension_semantics = [#tpu.dimension_semantics<parallel>], iteration_bounds = array<i64: 2>, scalar_prefetch = 0 : i64, scratch_operands = 1 : i64, tpu.core_type = #tpu.core_type<tc>, window_params = [{transform_indices = @transform_0, window_bounds = array<i64: 1, 4, 325>}, {pipeline_mode = #tpu.pipeline_mode<synchronous>, transform_indices = @transform_1, window_bounds = array<i64: 32, 16>}, {pipeline_mode = #tpu.pipeline_mode<synchronous>, transform_indices = @transform_2, window_bounds = array<i64: 32, 1>}, {pipeline_mode = #tpu.pipeline_mode<synchronous>, transform_indices = @transform_3, window_bounds = array<i64: 32, 1>}, {transform_indices = @transform_4, window_bounds = array<i64: 1, 32, 306>}]} {
    %c0 = arith.constant 0 : index
    %c0_0 = arith.constant 0 : index
    %c0_1 = arith.constant 0 : index
    %0 = vector.load %arg1[%c0, %c0_0, %c0_1] : memref<1x4x325xbf16, #tpu.memory_space<vmem>>, vector<1x4x306xbf16>
    %1 = vector.shape_cast %0 : vector<1x4x306xbf16> to vector<4x306xbf16>
    %c0_2 = arith.constant 0 : index
    %c0_3 = arith.constant 0 : index
    %2 = vector.load %arg6[%c0_2, %c0_3] : memref<16x306xbf16, #tpu.memory_space<vmem>>, vector<4x306xbf16>
    tpu.vector_store %arg6[%c0_2, %c0_3], %1 {strides = array<i32>} : memref<16x306xbf16, #tpu.memory_space<vmem>>, vector<4x306xbf16>,
    %c0_4 = arith.constant 0 : index
    %c0_5 = arith.constant 0 : index
    %c1 = arith.constant 1 : index
    %3 = vector.load %arg1[%c0_4, %c0_5, %c1] : memref<1x4x325xbf16, #tpu.memory_space<vmem>>, vector<1x4x306xbf16>
    %4 = vector.shape_cast %3 : vector<1x4x306xbf16> to vector<4x306xbf16>
    %c4 = arith.constant 4 : index
    %c0_6 = arith.constant 0 : index
    %5 = vector.load %arg6[%c4, %c0_6] : memref<16x306xbf16, #tpu.memory_space<vmem>>, vector<4x306xbf16>
    tpu.vector_store %arg6[%c4, %c0_6], %4 {strides = array<i32>} : memref<16x306xbf16, #tpu.memory_space<vmem>>, vector<4x306xbf16>,
    %c0_7 = arith.constant 0 : index
    %c0_8 = arith.constant 0 : index
    %c18 = arith.constant 18 : index
    %6 = vector.load %arg1[%c0_7, %c0_8, %c18] : memref<1x4x325xbf16, #tpu.memory_space<vmem>>, vector<1x4x306xbf16>
    %7 = vector.shape_cast %6 : vector<1x4x306xbf16> to vector<4x306xbf16>
    %c8 = arith.constant 8 : index
    %c0_9 = arith.constant 0 : index
    %8 = vector.load %arg6[%c8, %c0_9] : memref<16x306xbf16, #tpu.memory_space<vmem>>, vector<4x306xbf16>
    tpu.vector_store %arg6[%c8, %c0_9], %7 {strides = array<i32>} : memref<16x306xbf16, #tpu.memory_space<vmem>>, vector<4x306xbf16>,
    %c0_10 = arith.constant 0 : index
    %c0_11 = arith.constant 0 : index
    %c19 = arith.constant 19 : index
    %9 = vector.load %arg1[%c0_10, %c0_11, %c19] : memref<1x4x325xbf16, #tpu.memory_space<vmem>>, vector<1x4x306xbf16>
    %10 = vector.shape_cast %9 : vector<1x4x306xbf16> to vector<4x306xbf16>
    %c12 = arith.constant 12 : index
    %c0_12 = arith.constant 0 : index
    %11 = vector.load %arg6[%c12, %c0_12] : memref<16x306xbf16, #tpu.memory_space<vmem>>, vector<4x306xbf16>
    tpu.vector_store %arg6[%c12, %c0_12], %10 {strides = array<i32>} : memref<16x306xbf16, #tpu.memory_space<vmem>>, vector<4x306xbf16>,
    %c0_13 = arith.constant 0 : index
    %c0_14 = arith.constant 0 : index
    %12 = vector.load %arg2[%c0_13, %c0_14] : memref<32x16xbf16, #tpu.memory_space<vmem>>, vector<32x16xbf16>
    %c0_15 = arith.constant 0 : index
    %c0_16 = arith.constant 0 : index
    %13 = vector.load %arg6[%c0_15, %c0_16] : memref<16x306xbf16, #tpu.memory_space<vmem>>, vector<16x306xbf16>
    %cst = arith.constant dense<0.000000e+00> : vector<32x306xf32>
    %14 = tpu.matmul %12, %13, %cst {dimension_numbers = #tpu.dot_dimension_numbers<[1], [0], [0], [1], [0, 0, 1, 1], [], []>} : vector<32x16xbf16>, vector<16x306xbf16>, vector<32x306xf32> -> vector<32x306xf32>
    %c0_17 = arith.constant 0 : index
    %c0_18 = arith.constant 0 : index
    %15 = vector.load %arg3[%c0_17, %c0_18] : memref<32x1xf32, #tpu.memory_space<vmem>>, vector<32x1xf32>
    %16 = vector.broadcast %15 : vector<32x1xf32> to vector<32x306xf32>
    %17 = arith.mulf %14, %16 : vector<32x306xf32>
    %c0_19 = arith.constant 0 : index
    %c0_20 = arith.constant 0 : index
    %18 = vector.load %arg4[%c0_19, %c0_20] : memref<32x1xf32, #tpu.memory_space<vmem>>, vector<32x1xf32>
    %19 = vector.broadcast %18 : vector<32x1xf32> to vector<32x306xf32>
    %20 = arith.addf %17, %19 : vector<32x306xf32>
    %cst_21 = arith.constant 0.00999999977 : f32
    %21 = vector.broadcast %cst_21 : f32 to vector<32x306xf32>
    %22 = arith.mulf %21, %20 : vector<32x306xf32>
    %23 = arith.maximumf %20, %22 : vector<32x306xf32>
    %c0_22 = arith.constant 0 : index
    %c0_23 = arith.constant 0 : index
    %c0_24 = arith.constant 0 : index
    %24 = vector.load %arg5[%c0_22, %c0_23, %c0_24] : memref<1x32x306xf32, #tpu.memory_space<vmem>>, vector<1x32x306xf32>
    %25 = vector.shape_cast %24 : vector<1x32x306xf32> to vector<32x306xf32>
    %26 = vector.shape_cast %23 : vector<32x306xf32> to vector<1x32x306xf32>
    tpu.vector_store %arg5[%c0_22, %c0_23, %c0_24], %26 {strides = array<i32>} : memref<1x32x306xf32, #tpu.memory_space<vmem>>, vector<1x32x306xf32>,
    return
  }
  func.func @transform_0(%arg0: i32) -> (i32, i32, i32) {
    %c0_i32 = arith.constant 0 : i32
    %c0_i32_0 = arith.constant 0 : i32
    %c0_i32_1 = arith.constant 0 : i32
    return %arg0, %c0_i32, %c0_i32_0 : i32, i32, i32
  }
  func.func @transform_1(%arg0: i32) -> (i32, i32) {
    %c0_i32 = arith.constant 0 : i32
    %c0_i32_0 = arith.constant 0 : i32
    %c0_i32_1 = arith.constant 0 : i32
    return %c0_i32, %c0_i32_0 : i32, i32
  }
  func.func @transform_2(%arg0: i32) -> (i32, i32) {
    %c0_i32 = arith.constant 0 : i32
    %c0_i32_0 = arith.constant 0 : i32
    %c0_i32_1 = arith.constant 0 : i32
    return %c0_i32, %c0_i32_0 : i32, i32
  }
  func.func @transform_3(%arg0: i32) -> (i32, i32) {
    %c0_i32 = arith.constant 0 : i32
    %c0_i32_0 = arith.constant 0 : i32
    %c0_i32_1 = arith.constant 0 : i32
    return %c0_i32, %c0_i32_0 : i32, i32
  }
  func.func @transform_4(%arg0: i32) -> (i32, i32, i32) {
    %c0_i32 = arith.constant 0 : i32
    %c0_i32_0 = arith.constant 0 : i32
    %c0_i32_1 = arith.constant 0 : i32
    return %arg0, %c0_i32, %c0_i32_0 : i32, i32, i32
  }
}

</mosaic_0001>

<llo_original>
// kernel: tpu_custom_call.1
$region0: #{tpu_custom_call.1}
  #allocation0 [shape = 'u32[]', space=smem, size = 0x4, offset = 0x4, fixed_abs, tag = 'smem constant byte address 0x4 - core index']
  #allocation1 [shape = 'u32[72,128]{1,0:T(1,128)}', space=vmem, size = 0x9000, scoped, tag = 'internal scratch']
  #allocation2 [shape = 'bf16[16,306]{1,0:T(8,128)(2,1)}', space=vmem, size = 0x3000, scoped, tag = 'scratch operand']
  %s0 = inlined_call_operand.vmem [shape: bf16[2,4,325], index: 0, kind: input, shape index: {}]
  %s1 = inlined_call_operand.vmem [shape: bf16[32,16], index: 1, kind: input, shape index: {}]
  %s2 = inlined_call_operand.vmem [shape: f32[32,1], index: 2, kind: input, shape index: {}]
  %s3 = inlined_call_operand.vmem [shape: f32[32,1], index: 3, kind: input, shape index: {}]
  %s4 = inlined_call_operand.hbm [shape: f32[2,32,306], index: 4, kind: output, shape index: {}]
  %s5 = sld [smem:[#allocation0]]
  $region49: #{tpu_custom_call.1} parent=0
    _
  %s7 = ssub.s32 1, %s5
  %s8 = scalar_select 0, %s7, %s5
  $region1: #{tpu_custom_call.1} parent=0
    #allocation3 [shape = 'u8[98304]{0}', space=vmem, size = 0x18000, scoped, tag = 'output window, operand 0']
    #allocation4 [shape = 's32[2]{0}', space=sflag, size = 0x8, scoped, tag = 'scoped memory for tpu_custom_call.1']
    %9 = vsyncpa [#allocation4], 0
    %s10 = scalar_lea.sflag [#allocation4], 1
    %11 = vsyncpa %s10, 0
    loop: start=0, step=1, limit=4
    $region2: #{tpu_custom_call.1} parent=1 // loop_pre_header
      _
    $region3: #{tpu_custom_call.1} parent=1 // loop_header
      %s13 = sphi 0, %s17
      %p14 = scmp.ge.s32.totalorder %s13, 4
      %s23 = sphi 0, %s25
      %s26 = sphi 0, %s23
      %s27 = sphi 0, %s26
      %s43 = sphi 0, %s27
      %s47 = sphi 0, %s47
      %s49 = sphi 0, %s47
      %s50 = sphi 0, %s49
      %s64 = sphi 0, %s50
      %s68 = sphi 0, %s68
      %s70 = sphi 0, %s68
      %s71 = sphi 0, %s70
      %s85 = sphi 0, %s71
      %s89 = sphi 0, %s89
      %s91 = sphi 0, %s89
      %s92 = sphi 0, %s91
      %s106 = sphi 0, %s92
      %s112 = sphi 0, %s114
      %s115 = sphi 0, %s112
      %s116 = sphi 0, %s115
      %s132 = sphi 0, %s116
    $region4: #{tpu_custom_call.1} parent=1 // loop_header_branch
      %16 = sbr.rel (%p14) target = $region8
    $region5: #{tpu_custom_call.1} parent=1 // loop_body
      %s18 = ssub.s32 %s13, 1
      %s19 = ssub.s32 %s13, 2
      %s20 = sadd.s32 %s13, 1
      %s21 = ssub.s32 %s13, %s20
      %p22 = scmp.eq.s32.totalorder %s21, 0
      %s24 = sadd.s32 %s23, 1
      %s25 = scalar_select %p22, %s23, %s24
      %p28 = pneg %p22
      %p29 = scmp.eq.s32.totalorder %s13, 1
      %p30 = por %p28, %p29
      %p31 = scmp.ne.s32.totalorder %s23, %s26
      %p32 = scmp.eq.s32.totalorder %s13, 0
      %p33 = por %p31, %p32
      %p34 = scmp.ne.s32.totalorder %s23, %s26
      %p35 = scmp.eq.s32.totalorder %s18, 1
      %p36 = por %p34, %p35
      %p37 = scmp.ne.s32.totalorder %s26, %s27
      %p38 = scmp.eq.s32.totalorder %s18, 0
      %p39 = por %p37, %p38
      %p40 = scmp.ne.s32.totalorder %s26, %s27
      %p41 = scmp.eq.s32.totalorder %s19, 1
      %p42 = por %p40, %p41
      %p44 = scmp.ne.s32.totalorder %s27, %s43
      %p45 = scmp.eq.s32.totalorder %s19, 0
      %p46 = por %p44, %p45
      %s48 = sadd.s32 %s47, 1
      %p51 = scmp.eq.s32.totalorder %s13, 1
      %p52 = scmp.ne.s32.totalorder %s47, %s49
      %p53 = scmp.eq.s32.totalorder %s13, 0
      %p54 = por %p52, %p53
      %p55 = scmp.ne.s32.totalorder %s47, %s49
      %p56 = scmp.eq.s32.totalorder %s18, 1
      %p57 = por %p55, %p56
      %p58 = scmp.ne.s32.totalorder %s49, %s50
      %p59 = scmp.eq.s32.totalorder %s18, 0
      %p60 = por %p58, %p59
      %p61 = scmp.ne.s32.totalorder %s49, %s50
      %p62 = scmp.eq.s32.totalorder %s19, 1
      %p63 = por %p61, %p62
      %p65 = scmp.ne.s32.totalorder %s50, %s64
      %p66 = scmp.eq.s32.totalorder %s19, 0
      %p67 = por %p65, %p66
      %s69 = sadd.s32 %s68, 1
      %p72 = scmp.eq.s32.totalorder %s13, 1
      %p73 = scmp.ne.s32.totalorder %s68, %s70
      %p74 = scmp.eq.s32.totalorder %s13, 0
      %p75 = por %p73, %p74
      %p76 = scmp.ne.s32.totalorder %s68, %s70
      %p77 = scmp.eq.s32.totalorder %s18, 1
      %p78 = por %p76, %p77
      %p79 = scmp.ne.s32.totalorder %s70, %s71
      %p80 = scmp.eq.s32.totalorder %s18, 0
      %p81 = por %p79, %p80
      %p82 = scmp.ne.s32.totalorder %s70, %s71
      %p83 = scmp.eq.s32.totalorder %s19, 1
      %p84 = por %p82, %p83
      %p86 = scmp.ne.s32.totalorder %s71, %s85
      %p87 = scmp.eq.s32.totalorder %s19, 0
      %p88 = por %p86, %p87
      %s90 = sadd.s32 %s89, 1
      %p93 = scmp.eq.s32.totalorder %s13, 1
      %p94 = scmp.ne.s32.totalorder %s89, %s91
      %p95 = scmp.eq.s32.totalorder %s13, 0
      %p96 = por %p94, %p95
      %p97 = scmp.ne.s32.totalorder %s89, %s91
      %p98 = scmp.eq.s32.totalorder %s18, 1
      %p99 = por %p97, %p98
      %p100 = scmp.ne.s32.totalorder %s91, %s92
      %p101 = scmp.eq.s32.totalorder %s18, 0
      %p102 = por %p100, %p101
      %p103 = scmp.ne.s32.totalorder %s91, %s92
      %p104 = scmp.eq.s32.totalorder %s19, 1
      %p105 = por %p103, %p104
      %p107 = scmp.ne.s32.totalorder %s92, %s106
      %p108 = scmp.eq.s32.totalorder %s19, 0
      %p109 = por %p107, %p108
      %s110 = ssub.s32 %s13, %s20
      %p111 = scmp.eq.s32.totalorder %s110, 0
      %s113 = sadd.s32 %s112, 1
      %s114 = scalar_select %p111, %s112, %s113
      %p117 = pneg %p111
      %p118 = scmp.eq.s32.totalorder %s13, 1
      %p119 = por %p117, %p118
      %p120 = scmp.ne.s32.totalorder %s112, %s115
      %p121 = scmp.eq.s32.totalorder %s13, 0
      %p122 = por %p120, %p121
      %p123 = scmp.ne.s32.totalorder %s112, %s115
      %p124 = scmp.eq.s32.totalorder %s18, 1
      %p125 = por %p123, %p124
      %p126 = scmp.ne.s32.totalorder %s115, %s116
      %p127 = scmp.eq.s32.totalorder %s18, 0
      %p128 = por %p126, %p127
      %p129 = scmp.ne.s32.totalorder %s115, %s116
      %p130 = scmp.eq.s32.totalorder %s19, 1
      %p131 = por %p129, %p130
      %p133 = scmp.ne.s32.totalorder %s116, %s132
      %p134 = scmp.eq.s32.totalorder %s19, 0
      %p135 = por %p133, %p134
      %p136 = scmp.le.s32.totalorder 1, %s13
      %p137 = scmp.lt.s32.totalorder %s13, 3
      %p138 = pnand %p136, %p137
      %p139 = pneg %p138
      // Predicated region
      $region9: #{tpu_custom_call.1} parent=5 // pred_check
        _
      $region10: #{tpu_custom_call.1} parent=5 // pred_check_branch
        %141 = sbr.rel (%p138) target = $region12
      $region11: #{tpu_custom_call.1} parent=5 // pred_region
        %s142 = ssub.s32 %s13, 1
        // Predicated region
        $region13: #{tpu_custom_call.1} parent=11 // pred_check
          %p143 = pneg %p60
        $region14: #{tpu_custom_call.1} parent=11 // pred_check_branch
          %145 = sbr.rel (%p143) target = $region16
        $region15: #{tpu_custom_call.1} parent=11 // pred_region
          _
        $region16: #{tpu_custom_call.1} parent=11 // pred_fallthru
          _
        // Predicated region
        $region17: #{tpu_custom_call.1} parent=11 // pred_check
          %p146 = pneg %p81
        $region18: #{tpu_custom_call.1} parent=11 // pred_check_branch
          %148 = sbr.rel (%p146) target = $region20
        $region19: #{tpu_custom_call.1} parent=11 // pred_region
          _
        $region20: #{tpu_custom_call.1} parent=11 // pred_fallthru
          _
        // Predicated region
        $region21: #{tpu_custom_call.1} parent=11 // pred_check
          %p149 = pneg %p102
        $region22: #{tpu_custom_call.1} parent=11 // pred_check_branch
          %151 = sbr.rel (%p149) target = $region24
        $region23: #{tpu_custom_call.1} parent=11 // pred_region
          _
        $region24: #{tpu_custom_call.1} parent=11 // pred_fallthru
          _
      $region12: #{tpu_custom_call.1} parent=5 // pred_fallthru
        _
      %p152 = scmp.lt.s32.totalorder %s13, 2
      // Predicated region
      $region25: #{tpu_custom_call.1} parent=5 // pred_check
        %p153 = pneg %p152
      $region26: #{tpu_custom_call.1} parent=5 // pred_check_branch
        %155 = sbr.rel (%p153) target = $region28
      $region27: #{tpu_custom_call.1} parent=5 // pred_region
        // Predicated region
        $region29: #{tpu_custom_call.1} parent=27 // pred_check
          %p156 = pneg %p33
        $region30: #{tpu_custom_call.1} parent=27 // pred_check_branch
          %158 = sbr.rel (%p156) target = $region32
        $region31: #{tpu_custom_call.1} parent=27 // pred_region
          %p159 = scmp.lt.s32.totalorder %s13, 1
          %s160 = scalar_select %p159, %s13, 1
          %s161 = smul.addr %s160, 3
          %s162 = smul.addr %s161, 2
          %s163 = scalar_lea.vmem %s0, %s162
        $region32: #{tpu_custom_call.1} parent=27 // pred_fallthru
          _
      $region28: #{tpu_custom_call.1} parent=5 // pred_fallthru
        _
      %p164 = scmp.le.s32.totalorder 1, %s13
      %p165 = scmp.lt.s32.totalorder %s13, 3
      %p166 = pnand %p164, %p165
      %p167 = pneg %p166
      // Predicated region
      $region33: #{tpu_custom_call.1} parent=5 // pred_check
        _
      $region34: #{tpu_custom_call.1} parent=5 // pred_check_branch
        %169 = sbr.rel (%p166) target = $region36
      $region35: #{tpu_custom_call.1} parent=5 // pred_region
        %s170 = ssub.s32 %s13, 1
        %p171 = scmp.lt.s32.totalorder %s18, 1
        %s172 = scalar_select %p171, %s18, 1
        %s173 = smul.addr %s172, 3
        %s174 = smul.addr %s173, 2
        %s175 = scalar_lea.vmem %s0, %s174
        %p176 = pneg %p39
        %p177 = pneg %p36
        %p178 = pneg %p60
        %p179 = pneg %p57
        %p180 = pneg %p81
        %p181 = pneg %p78
        %p182 = pneg %p102
        %p183 = pneg %p99
        %p184 = pneg %p128
        %p185 = pneg %p125
        %s186 = sand.u32 %s115, 1
        %s187 = scalar_lea.sflag [#allocation4], %s186
        %s188 = sand.u32 %s115, 1
        %s189 = smul.addr %s188, 96
        %s190 = scalar_lea.vmem [#allocation3], %s189
        %p191 = scmp.lt.s32.totalorder %s18, 1
        %s192 = scalar_select %p191, %s18, 1
        %s193 = smul.addr %s192, 3
        %s194 = smul.addr %s193, 2
        %s195 = scalar_lea.vmem %s0, %s194
        %v197 = vld [vmem:[%s195] sm:$0x3f]
        %199 = vst [vmem:[#allocation1] ss:$2 sm:$0xff] %v197
        %v200 = vld.sshfl [vmem:[#allocation1] sm:$0xff pattern:$0x75643120]
        %v201 = vld.sshfl [vmem:[#allocation1 + $0x8] sm:$0xff pattern:$0x75643120]
        %204 = vst [vmem:[#allocation2] sm:$0x33] %v200
        %vm205 = vcmask 402432
        %206 = vst.msk [vmem:[#allocation2 + $0x8] sm:$0x3] %vm205, %v201
        %v207 = vld [vmem:[%s195] sm:$0x3f]
        %s209 = scalar_lea.vmem [#allocation1], 1
        %210 = vst [vmem:[%s209] ss:$2 sm:$0xff] %v207
        %v211 = vld.sshfl [vmem:[#allocation1] sm:$0xff pattern:$0x75643120]
        %v213 = vld.sshfl [vmem:[#allocation1 + $0x8] sm:$0xff pattern:$0x75643120]
        %215 = vrot.lane.b32.xlu0 %v211, 127
        %v216 = vpop.permute.xlu0 %215
        %217 = vrot.lane.b32.xlu0 %v213, 127
        %v218 = vpop.permute.xlu0 %217
        %v219 = vrot.slane %v216, 4
        %v220 = vrot.slane %v218, 4
        %vm221 = vcmask 1043456
        %v222 = vsel %vm221, %v219, %v220
        %vm223 = vcmask 1039360
        %v224 = vsel %vm223, %v216, %v222
        %227 = vst [vmem:[#allocation2] sm:$0xcc] %v224
        %vm228 = vcmask 404482
        %229 = vst.msk [vmem:[#allocation2 + $0x8] sm:$0xc] %vm228, %v218
        %v230 = vld [vmem:[%s195] sm:$0x3f]
        %232 = vst [vmem:[#allocation1] ss:$2 sm:$0xff] %v230
        %v233 = vld.sshfl [vmem:[#allocation1] sm:$0xff pattern:$0x75643120]
        %v235 = vld.sshfl [vmem:[#allocation1 + $0x8] sm:$0xff pattern:$0x75643120]
        %237 = vrot.lane.b32.xlu0 %v233, 110
        %v238 = vpop.permute.xlu0 %237
        %239 = vrot.lane.b32.xlu0 %v235, 110
        %v240 = vpop.permute.xlu0 %239
        %v241 = vrot.slane %v238, 4
        %v242 = vrot.slane %v240, 4
        %v243 = vsel %vm221, %v241, %v242
        %vm244 = vcmask 900096
        %v245 = vsel %vm244, %v238, %v243
        %248 = vst [vmem:[#allocation2 + $0xc] sm:$0x33] %v245
        %249 = vst.msk [vmem:[#allocation2 + $0x14] sm:$0x3] %vm205, %v240
        %v250 = vld [vmem:[%s195] sm:$0x3f]
        %s252 = scalar_lea.vmem [#allocation1], 1
        %253 = vst [vmem:[%s252] ss:$2 sm:$0xff] %v250
        %v254 = vld.sshfl [vmem:[#allocation1] sm:$0xff pattern:$0x75643120]
        %v256 = vld.sshfl [vmem:[#allocation1 + $0x8] sm:$0xff pattern:$0x75643120]
        %258 = vrot.lane.b32.xlu0 %v254, 109
        %v259 = vpop.permute.xlu0 %258
        %260 = vrot.lane.b32.xlu0 %v256, 109
        %v261 = vpop.permute.xlu0 %260
        %v262 = vrot.slane %v259, 4
        %v263 = vrot.slane %v261, 4
        %v264 = vsel %vm221, %v262, %v263
        %vm265 = vcmask 891904
        %v266 = vsel %vm265, %v259, %v264
        %269 = vst [vmem:[#allocation2 + $0xc] sm:$0xcc] %v266
        %270 = vst.msk [vmem:[#allocation2 + $0x14] sm:$0xc] %vm228, %v261
        %v271 = vld [vmem:[%s1] sm:$0xf]
        %v272 = vld [vmem:[%s1 + $0x4] sm:$0xf]
        %v273 = vld [vmem:[%s1 + $0x8] sm:$0xf]
        %v274 = vld [vmem:[%s1 + $0xc] sm:$0xf]
        %v275 = vld [vmem:[#allocation2] sm:$0xff]
        %v276 = vld [vmem:[#allocation2 + $0x8] sm:$0xf]
        %v277 = vld [vmem:[#allocation2 + $0xc] sm:$0xff]
        %v278 = vld [vmem:[#allocation2 + $0x14] sm:$0xf]
        %v283 = vunpack.c.l.b16 %v271
        %v284 = vunpack.c.l.b16 %v272
        %v285 = vunpack.c.l.b16 %v273
        %v286 = vunpack.c.l.b16 %v274
        %v287 = vpack.c.b16 %v284, %v283
        %v288 = vpack.c.b16 %v286, %v285
        %v293 = vunpack.c.l.b16 %v275
        %v294 = vunpack.c.h.b16 %v275
        %v295 = vunpack.c.l.b16 %v276
        %v296 = vunpack.c.l.b16 %v277
        %v297 = vunpack.c.h.b16 %v277
        %v298 = vunpack.c.l.b16 %v278
        %v299 = vpack.c.b16 %v296, %v293
        %v300 = vpack.c.b16 %v297, %v294
        %v301 = vpack.c.b16 %v298, %v295
        %vm305 = vcmask 130048
        %v307 = vsel %vm305, %v287, 0
        %v310 = vsel %vm305, %v288, 0
        %312 = vmatpush.bf16.msra.mxu0 0
        %313 = vmatpush.bf16.msra.mxu0 0
        %314 = vmatpush.bf16.msra.mxu0 0
        %315 = vmatpush.bf16.msra.mxu0 0
        %316 = vmatpush.bf16.msra.mxu0 0
        %317 = vmatpush.bf16.msra.mxu0 0
        %318 = vmatpush.bf16.msra.mxu0 0
        %319 = vmatpush.bf16.msra.mxu0 %v299
        %320 = vmatmul.bf16.gmra.mxu0 %v307
        %v321 = vpop.f32.mrf.mxu0
        %v322 = vadd.f32 0.0, %v321
        %v323 = vpop.f32.mrf.mxu0
        %v324 = vadd.f32 0.0, %v323
        %325 = vmatmul.bf16.gmra.mxu0 %v310
        %v326 = vpop.f32.mrf.mxu0
        %v327 = vadd.f32 0.0, %v326
        %v328 = vpop.f32.mrf.mxu0
        %v329 = vadd.f32 0.0, %v328
        %330 = vdwg.mxu0
        %331 = vmatpush.bf16.msra.mxu0 0
        %332 = vmatpush.bf16.msra.mxu0 0
        %333 = vmatpush.bf16.msra.mxu0 0
        %334 = vmatpush.bf16.msra.mxu0 0
        %335 = vmatpush.bf16.msra.mxu0 0
        %336 = vmatpush.bf16.msra.mxu0 0
        %337 = vmatpush.bf16.msra.mxu0 0
        %338 = vmatpush.bf16.msra.mxu0 %v300
        %339 = vmatmul.bf16.gmra.mxu0 %v307
        %v340 = vpop.f32.mrf.mxu0
        %v341 = vadd.f32 0.0, %v340
        %v342 = vpop.f32.mrf.mxu0
        %v343 = vadd.f32 0.0, %v342
        %344 = vmatmul.bf16.gmra.mxu0 %v310
        %v345 = vpop.f32.mrf.mxu0
        %v346 = vadd.f32 0.0, %v345
        %v347 = vpop.f32.mrf.mxu0
        %v348 = vadd.f32 0.0, %v347
        %349 = vdwg.mxu0
        %350 = vmatpush.bf16.msra.mxu0 0
        %351 = vmatpush.bf16.msra.mxu0 0
        %352 = vmatpush.bf16.msra.mxu0 0
        %353 = vmatpush.bf16.msra.mxu0 0
        %354 = vmatpush.bf16.msra.mxu0 0
        %355 = vmatpush.bf16.msra.mxu0 0
        %356 = vmatpush.bf16.msra.mxu0 0
        %357 = vmatpush.bf16.msra.mxu0 %v301
        %358 = vmatmul.bf16.gmra.mxu0 %v307
        %v359 = vpop.f32.mrf.mxu0
        %v360 = vadd.f32 0.0, %v359
        %v361 = vpop.f32.mrf.mxu0
        %v362 = vadd.f32 0.0, %v361
        %363 = vmatmul.bf16.gmra.mxu0 %v310
        %v364 = vpop.f32.mrf.mxu0
        %v365 = vadd.f32 0.0, %v364
        %v366 = vpop.f32.mrf.mxu0
        %v367 = vadd.f32 0.0, %v366
        %368 = vdwg.mxu0
        %v369 = vld [vmem:[%s2] sm:$0xff]
        %v370 = vld [vmem:[%s2 + $0x8] sm:$0xff]
        %v371 = vld [vmem:[%s2 + $0x10] sm:$0xff]
        %v372 = vld [vmem:[%s2 + $0x18] sm:$0xff]
        %374 = vset.pattern.permute.xlu0 0
        %375 = vperm.xlu0 %374, %v369
        %v376 = vpop.permute.xlu0 %375
        %379 = vset.pattern.permute.xlu0 0
        %380 = vperm.xlu0 %379, %v370
        %v381 = vpop.permute.xlu0 %380
        %384 = vset.pattern.permute.xlu0 0
        %385 = vperm.xlu0 %384, %v371
        %v386 = vpop.permute.xlu0 %385
        %389 = vset.pattern.permute.xlu0 0
        %390 = vperm.xlu0 %389, %v372
        %v391 = vpop.permute.xlu0 %390
        %v393 = vmul.f32 %v322, %v376
        %v394 = vmul.f32 %v341, %v376
        %v395 = vmul.f32 %v360, %v376
        %v396 = vmul.f32 %v324, %v381
        %v397 = vmul.f32 %v343, %v381
        %v398 = vmul.f32 %v362, %v381
        %v399 = vmul.f32 %v327, %v386
        %v400 = vmul.f32 %v346, %v386
        %v401 = vmul.f32 %v365, %v386
        %v402 = vmul.f32 %v329, %v391
        %v403 = vmul.f32 %v348, %v391
        %v404 = vmul.f32 %v367, %v391
        %v405 = vld [vmem:[%s3] sm:$0xff]
        %v406 = vld [vmem:[%s3 + $0x8] sm:$0xff]
        %v407 = vld [vmem:[%s3 + $0x10] sm:$0xff]
        %v408 = vld [vmem:[%s3 + $0x18] sm:$0xff]
        %410 = vset.pattern.permute.xlu0 0
        %411 = vperm.xlu0 %410, %v405
        %v412 = vpop.permute.xlu0 %411
        %415 = vset.pattern.permute.xlu0 0
        %416 = vperm.xlu0 %415, %v406
        %v417 = vpop.permute.xlu0 %416
        %420 = vset.pattern.permute.xlu0 0
        %421 = vperm.xlu0 %420, %v407
        %v422 = vpop.permute.xlu0 %421
        %425 = vset.pattern.permute.xlu0 0
        %426 = vperm.xlu0 %425, %v408
        %v427 = vpop.permute.xlu0 %426
        %v429 = vadd.f32 %v393, %v412
        %v430 = vadd.f32 %v394, %v412
        %v431 = vadd.f32 %v395, %v412
        %v432 = vadd.f32 %v396, %v417
        %v433 = vadd.f32 %v397, %v417
        %v434 = vadd.f32 %v398, %v417
        %v435 = vadd.f32 %v399, %v422
        %v436 = vadd.f32 %v400, %v422
        %v437 = vadd.f32 %v401, %v422
        %v438 = vadd.f32 %v402, %v427
        %v439 = vadd.f32 %v403, %v427
        %v440 = vadd.f32 %v404, %v427
        %v441 = vmul.f32 %v429, 0.01
        %v442 = vmul.f32 %v430, 0.01
        %v443 = vmul.f32 %v431, 0.01
        %v444 = vmul.f32 %v432, 0.01
        %v445 = vmul.f32 %v433, 0.01
        %v446 = vmul.f32 %v434, 0.01
        %v447 = vmul.f32 %v435, 0.01
        %v448 = vmul.f32 %v436, 0.01
        %v449 = vmul.f32 %v437, 0.01
        %v450 = vmul.f32 %v438, 0.01
        %v451 = vmul.f32 %v439, 0.01
        %v452 = vmul.f32 %v440, 0.01
        %v453 = vmax.f32 %v429, %v441
        %v454 = vmax.f32 %v430, %v442
        %v455 = vmax.f32 %v431, %v443
        %v456 = vmax.f32 %v432, %v444
        %v457 = vmax.f32 %v433, %v445
        %v458 = vmax.f32 %v434, %v446
        %v459 = vmax.f32 %v435, %v447
        %v460 = vmax.f32 %v436, %v448
        %v461 = vmax.f32 %v437, %v449
        %v462 = vmax.f32 %v438, %v450
        %v463 = vmax.f32 %v439, %v451
        %v464 = vmax.f32 %v440, %v452
        %465 = vst [vmem:[%s190] sm:$0xff] %v453
        %466 = vst [vmem:[%s190 + $0x8] sm:$0xff] %v454
        %vm467 = vcmask 408576
        %468 = vst.msk [vmem:[%s190 + $0x10] sm:$0xff] %vm467, %v455
        %469 = vst [vmem:[%s190 + $0x18] sm:$0xff] %v456
        %470 = vst [vmem:[%s190 + $0x20] sm:$0xff] %v457
        %471 = vst.msk [vmem:[%s190 + $0x28] sm:$0xff] %vm467, %v458
        %472 = vst [vmem:[%s190 + $0x30] sm:$0xff] %v459
        %473 = vst [vmem:[%s190 + $0x38] sm:$0xff] %v460
        %474 = vst.msk [vmem:[%s190 + $0x40] sm:$0xff] %vm467, %v461
        %475 = vst [vmem:[%s190 + $0x48] sm:$0xff] %v462
        %476 = vst [vmem:[%s190 + $0x50] sm:$0xff] %v463
        %477 = vst.msk [vmem:[%s190 + $0x58] sm:$0xff] %vm467, %v464
        %s478 = sand.u32 %s115, 1
        %s479 = scalar_lea.sflag [#allocation4], %s478
        %s480 = sand.u32 %s115, 1
        %s481 = smul.addr %s480, 96
        %s482 = scalar_lea.vmem [#allocation3], %s481
        // Predicated region
        $region37: #{tpu_custom_call.1} parent=35 // pred_check
          %p483 = pneg %p125
        $region38: #{tpu_custom_call.1} parent=35 // pred_check_branch
          %485 = sbr.rel (%p483) target = $region40
        $region39: #{tpu_custom_call.1} parent=35 // pred_region
          %487 = vsyncadd %s479, 0
          %s488 = smul.addr %s18, 12
          %s489 = smul.addr %s488, 8
          %s490 = scalar_lea.hbm %s4, %s489
          %s491 = sshll.u32 %s482, 4
          %s492 = int_to_ptr.vmem [resolvable:$true] %s491
          %s493 = sshll.u32 %s490, 4
          %s494 = int_to_ptr.hbm [resolvable:$true] %s493
          %499 = dma.vmem_to_hbm [thread:$0]  %s492, 1536, %s494, %s479, 384, 384, 24
        $region40: #{tpu_custom_call.1} parent=35 // pred_fallthru
          _
      $region36: #{tpu_custom_call.1} parent=5 // pred_fallthru
        _
      %p500 = scmp.le.s32.totalorder 2, %s13
      // Predicated region
      $region41: #{tpu_custom_call.1} parent=5 // pred_check
        %p501 = pneg %p500
      $region42: #{tpu_custom_call.1} parent=5 // pred_check_branch
        %503 = sbr.rel (%p501) target = $region44
      $region43: #{tpu_custom_call.1} parent=5 // pred_region
        %s504 = ssub.s32 %s13, 2
        // Predicated region
        $region45: #{tpu_custom_call.1} parent=43 // pred_check
          %p505 = pneg %p131
        $region46: #{tpu_custom_call.1} parent=43 // pred_check_branch
          %507 = sbr.rel (%p505) target = $region48
        $region47: #{tpu_custom_call.1} parent=43 // pred_region
          %s508 = sand.u32 %s116, 1
          %s509 = scalar_lea.sflag [#allocation4], %s508
          %s510 = sand.u32 %s116, 1
          %s511 = smul.addr %s510, 96
          %s512 = scalar_lea.vmem [#allocation3], %s511
          %514 = dma.done %s509, 1536
        $region48: #{tpu_custom_call.1} parent=43 // pred_fallthru
          _
      $region44: #{tpu_custom_call.1} parent=5 // pred_fallthru
        _
    $region6: #{tpu_custom_call.1} parent=1 // loop_footer
      %s17 = sadd.s32 1, %s13
    $region7: #{tpu_custom_call.1} parent=1 // loop_footer_branch
      %12 = sbr.rel target = $region3
    $region8: #{tpu_custom_call.1} parent=1 // loop_exit
      _
    %515 = vsyncpa [#allocation4], 1
    %s516 = scalar_lea.sflag [#allocation4], 1
    %517 = vsyncpa %s516, 1

</llo_original>
